<compile_context>
chip_gen: v7x
topology: tpu7x:2x2x1
jax: 0.10.0
libtpu: 0.0.40
codegen_flags: <defaults>
</compile_context>

<pallas_src>
import functools

import jax
import jax.numpy as jnp
import numpy as np
from jax import lax
from jax.experimental import pallas as pl
from jax.experimental.pallas import tpu as pltpu


# ------------------------------ Pallas kernel -------------------------------
def _dsconv_kernel(x_ref, dww_ref, dwb_ref, pww_ref, pwb_ref, out_ref):
    # x_ref  : (S, 1, M, C)    zero-padded, phase-decimated input of one batch element
    #                          x_ref[r, 0, m, c] == x_padded[b, m*S + r, c]
    # dww_ref: (K, C)          depthwise weights (tap-major)
    # dwb_ref: (1, C)          depthwise bias
    # pww_ref: (C, C_out)      pointwise weights (already transposed)
    # pwb_ref: (1, C_out)      pointwise bias
    # out_ref: (1, TL, C_out)  output tile
    S = x_ref.shape[0]
    K = dww_ref.shape[0]
    C = dww_ref.shape[1]
    TL = out_ref.shape[1]

    t = pl.program_id(1)
    l0 = pl.multiple_of(t * TL, TL)           # first output row of this tile

    # ---- depthwise conv (VPU, f32): y[l, c] = dw_b[c] + sum_k x[l*S + k, c] * dw_w[k, c]
    y = jnp.broadcast_to(dwb_ref[...].astype(jnp.float32), (TL, C))
    for k in range(K):                        # K is small & static -> unrolled
        r, q = k % S, k // S                  # tap k reads phase r at row offset q
        win = x_ref[r, 0, pl.ds(l0 + q, TL), :].astype(jnp.float32)      # (TL, C)
        y = y + win * dww_ref[k:k + 1, :].astype(jnp.float32)

    # ---- pointwise conv (MXU, f32 accumulate) + bias, single store
    out = jnp.dot(y, pww_ref[...].astype(jnp.float32),
                  preferred_element_type=jnp.float32)
    out_ref[0, :, :] = (out + pwb_ref[...].astype(jnp.float32)).astype(out_ref.dtype)


# ------------------------------ tile selection -------------------------------
def _round_up(a, b):
    return ((a + b - 1) // b) * b


def _choose_tile(l_out, s, c_in, c_out, k, itemsize):
    """Largest L_out-tile that keeps the (double-buffered) working set under a
    conservative VMEM budget (safe for v7x's smaller scoped VMEM)."""
    budget = 20 * 1024 * 1024
    tl = min(512, _round_up(l_out, 8))        # >=512 rows ~ HBM roofline when possible
    while True:
        nt = pl.cdiv(l_out, tl)
        lp = nt * tl
        m = lp + (k - 1) // s
        x_blk = 2 * s * m * c_in * itemsize               # double-buffered input block
        out_blk = 2 * tl * c_out * itemsize               # double-buffered output block
        w_blk = 2 * (k * c_in + c_in + c_in * c_out + c_out) * itemsize
        y_tmp = tl * c_in * 4                             # f32 depthwise accumulator
        if x_blk + out_blk + w_blk + y_tmp <= budget or tl <= 8:
            return tl
        tl = max(8, tl // 2)


# --------------------------------- wrapper -----------------------------------
@functools.partial(jax.jit, static_argnames=("stride",))
def dsconv_forward(x, dw_w, dw_b, pw_w, pw_b, *, stride):
    """x: (B, L, C_in).  dw_w: (C_in, 1, K), dw_b: (C_in,),
    pw_w: (C_out, C_in, 1), pw_b: (C_out,).  Returns (B, L_out, C_out)."""
    B, L, C = x.shape
    C_out = pw_w.shape[0]
    K = dw_w.shape[-1]
    S = int(stride)
    assert pw_w.shape[1] == C and dw_w.shape[0] == C

    pad = (K - 1) // 2
    L_out = (L + 2 * pad - K) // S + 1
    assert L_out > 0

    # ---- tiling over output rows
    TL = _choose_tile(L_out, S, C, C_out, K, x.dtype.itemsize)
    NT = pl.cdiv(L_out, TL)
    Lp = NT * TL                      # padded number of output rows (multiple of TL)
    Q = (K - 1) // S                  # max per-phase row offset
    M = Lp + Q                        # rows per phase array
    total = S * M                     # padded input length (covers every tap read)

    # ---- glue: zero-pad + polyphase decimation (the only extra HBM copy)
    x_full = jnp.zeros((B, total, C), x.dtype)
    copy_len = min(L, total - pad)    # taps never read beyond `total` (see derivation)
    x_full = lax.dynamic_update_slice(x_full, x[:, :copy_len, :], (0, pad, 0))
    # x_ph[r, b, m, c] = x_padded[b, m*S + r, c]
    x_ph = jnp.transpose(x_full.reshape(B, M, S, C), (2, 0, 1, 3))       # (S, B, M, C)

    # ---- weights in kernel-friendly layout (tiny, passed un-broadcast)
    dww = jnp.transpose(dw_w.reshape(C, K), (1, 0))                      # (K, C)
    dwb = dw_b.reshape(1, C)
    pww = jnp.transpose(pw_w.reshape(C_out, C), (1, 0))                  # (C, C_out)
    pwb = pw_b.reshape(1, C_out)

    out_padded = pl.pallas_call(
        _dsconv_kernel,
        out_shape=jax.ShapeDtypeStruct((B, Lp, C_out), x.dtype),
        grid_spec=pltpu.PrefetchScalarGridSpec(
            num_scalar_prefetch=0,
            grid=(B, NT),
            in_specs=[
                # constant index over t -> DMA'd once per batch element, reused
                pl.BlockSpec((S, 1, M, C), lambda b, t: (0, b, 0, 0)),
                pl.BlockSpec((K, C), lambda b, t: (0, 0)),
                pl.BlockSpec((1, C), lambda b, t: (0, 0)),
                pl.BlockSpec((C, C_out), lambda b, t: (0, 0)),
                pl.BlockSpec((1, C_out), lambda b, t: (0, 0)),
            ],
            out_specs=pl.BlockSpec((1, TL, C_out), lambda b, t: (b, t, 0)),
        ),
        compiler_params=pltpu.CompilerParams(
            dimension_semantics=("parallel", "parallel"),   # shard across v7x's 2 TCs
            vmem_limit_bytes=32 * 1024 * 1024,
        ),
    )(x_ph, dww, dwb, pww, pwb)

    if Lp != L_out:                   # only for ragged L_out (not hit in the demo)
        out_padded = out_padded[:, :L_out, :]
    return out_padded


# -------------------------------- reference ----------------------------------
def reference_dsconv(x, dw_w, dw_b, pw_w, pw_b, *, stride):
    B, L, C = x.shape
    K = dw_w.shape[-1]
    pad = (K - 1) // 2
    x_ncl = jnp.transpose(x, (0, 2, 1))
    y = lax.conv_general_dilated(
        x_ncl, dw_w, window_strides=(stride,), padding=((pad, pad),),
        dimension_numbers=("NCH", "OIH", "NCH"), feature_group_count=C)
    y = y + dw_b[None, :, None]
    z = lax.conv_general_dilated(
        y, pw_w, window_strides=(1,), padding=((0, 0),),
        dimension_numbers=("NCH", "OIH", "NCH"))
    z = z + pw_b[None, :, None]
    return jnp.transpose(z, (0, 2, 1))


# ----------------------------------- main -------------------------------------
if __name__ == "__main__":
    key = jax.random.PRNGKey(0)

    configs = [
        # (B, L, in_ch, out_ch, kernel_size, stride)
        (2, 16, 4, 32, 3, 1),
        (2, 32, 8, 128, 5, 2),   # lane-dense output path + strided depthwise
    ]

    for (B, L, C_in, C_out, K, S) in configs:
        key, kx, kdw, kdb, kpw, kpb = jax.random.split(key, 6)
        x = jax.random.normal(kx, (B, L, C_in), dtype=jnp.float32)

        bound_dw = 1.0 / np.sqrt(1 * K)            # PyTorch-style init bounds
        dw_w = jax.random.uniform(kdw, (C_in, 1, K), minval=-bound_dw,
                                  maxval=bound_dw, dtype=jnp.float32)
        dw_b = jax.random.uniform(kdb, (C_in,), minval=-bound_dw,
                                  maxval=bound_dw, dtype=jnp.float32)
        bound_pw = 1.0 / np.sqrt(C_in)
        pw_w = jax.random.uniform(kpw, (C_out, C_in, 1), minval=-bound_pw,
                                  maxval=bound_pw, dtype=jnp.float32)
        pw_b = jax.random.uniform(kpb, (C_out,), minval=-bound_pw,
                                  maxval=bound_pw, dtype=jnp.float32)

        out = dsconv_forward(x, dw_w, dw_b, pw_w, pw_b, stride=S)
        out = jax.block_until_ready(out)

        ref = reference_dsconv(x, dw_w, dw_b, pw_w, pw_b, stride=S)
        ref = jax.block_until_ready(ref)

        pad = (K - 1) // 2
        L_out = (L + 2 * pad - K) // S + 1
        assert out.shape == (B, L_out, C_out), out.shape
        np.testing.assert_allclose(np.asarray(out), np.asarray(ref),
                                   atol=1e-4, rtol=1e-4)

    print("KERNEL_OK")
</pallas_src>

<mosaic_0001>
module attributes {stable_mosaic.version = 11 : i64} {
  func.func @_dsconv_kernel(%arg0: i32, %arg1: i32, %arg2: memref<1x1x18x4xf32, #tpu.memory_space<vmem>>, %arg3: memref<3x4xf32, #tpu.memory_space<vmem>>, %arg4: memref<1x4xf32, #tpu.memory_space<vmem>>, %arg5: memref<4x32xf32, #tpu.memory_space<vmem>>, %arg6: memref<1x32xf32, #tpu.memory_space<vmem>>, %arg7: memref<1x16x32xf32, #tpu.memory_space<vmem>>) attributes {dimension_semantics = [#tpu.dimension_semantics<parallel>, #tpu.dimension_semantics<parallel>], iteration_bounds = array<i64: 2, 1>, scalar_prefetch = 0 : i64, scratch_operands = 0 : i64, tpu.core_type = #tpu.core_type<tc>, window_params = [{transform_indices = @transform_0, window_bounds = array<i64: 1, 1, 18, 4>}, {pipeline_mode = #tpu.pipeline_mode<synchronous>, transform_indices = @transform_1, window_bounds = array<i64: 3, 4>}, {pipeline_mode = #tpu.pipeline_mode<synchronous>, transform_indices = @transform_2, window_bounds = array<i64: 1, 4>}, {pipeline_mode = #tpu.pipeline_mode<synchronous>, transform_indices = @transform_3, window_bounds = array<i64: 4, 32>}, {pipeline_mode = #tpu.pipeline_mode<synchronous>, transform_indices = @transform_4, window_bounds = array<i64: 1, 32>}, {transform_indices = @transform_5, window_bounds = array<i64: 1, 16, 32>}]} {
    %c16_i32 = arith.constant 16 : i32
    %0 = arith.muli %arg1, %c16_i32 : i32
    %1 = tpu.assume_multiple %0, 16 : i32
    %c0 = arith.constant 0 : index
    %c0_0 = arith.constant 0 : index
    %2 = vector.load %arg4[%c0, %c0_0] : memref<1x4xf32, #tpu.memory_space<vmem>>, vector<1x4xf32>
    %3 = vector.shape_cast %2 : vector<1x4xf32> to vector<1x4xf32>
    %4 = vector.broadcast %3 : vector<1x4xf32> to vector<16x4xf32>
    %c0_i32 = arith.constant 0 : i32
    %5 = arith.addi %1, %c0_i32 : i32
    %c0_1 = arith.constant 0 : index
    %c0_2 = arith.constant 0 : index
    %6 = arith.index_cast %5 : i32 to index
    %c0_3 = arith.constant 0 : index
    %7 = vector.load %arg2[%c0_1, %c0_2, %6, %c0_3] : memref<1x1x18x4xf32, #tpu.memory_space<vmem>>, vector<1x1x16x4xf32>
    %8 = vector.shape_cast %7 : vector<1x1x16x4xf32> to vector<16x4xf32>
    %c0_4 = arith.constant 0 : index
    %c0_5 = arith.constant 0 : index
    %9 = vector.load %arg3[%c0_4, %c0_5] : memref<3x4xf32, #tpu.memory_space<vmem>>, vector<1x4xf32>
    %10 = vector.broadcast %9 : vector<1x4xf32> to vector<16x4xf32>
    %11 = arith.mulf %8, %10 : vector<16x4xf32>
    %12 = arith.addf %4, %11 : vector<16x4xf32>
    %c1_i32 = arith.constant 1 : i32
    %13 = arith.addi %1, %c1_i32 : i32
    %c0_6 = arith.constant 0 : index
    %c0_7 = arith.constant 0 : index
    %14 = arith.index_cast %13 : i32 to index
    %c0_8 = arith.constant 0 : index
    %15 = vector.load %arg2[%c0_6, %c0_7, %14, %c0_8] : memref<1x1x18x4xf32, #tpu.memory_space<vmem>>, vector<1x1x16x4xf32>
    %16 = vector.shape_cast %15 : vector<1x1x16x4xf32> to vector<16x4xf32>
    %c1 = arith.constant 1 : index
    %c0_9 = arith.constant 0 : index
    %17 = vector.load %arg3[%c1, %c0_9] : memref<3x4xf32, #tpu.memory_space<vmem>>, vector<1x4xf32>
    %18 = vector.broadcast %17 : vector<1x4xf32> to vector<16x4xf32>
    %19 = arith.mulf %16, %18 : vector<16x4xf32>
    %20 = arith.addf %12, %19 : vector<16x4xf32>
    %c2_i32 = arith.constant 2 : i32
    %21 = arith.addi %1, %c2_i32 : i32
    %c0_10 = arith.constant 0 : index
    %c0_11 = arith.constant 0 : index
    %22 = arith.index_cast %21 : i32 to index
    %c0_12 = arith.constant 0 : index
    %23 = vector.load %arg2[%c0_10, %c0_11, %22, %c0_12] : memref<1x1x18x4xf32, #tpu.memory_space<vmem>>, vector<1x1x16x4xf32>
    %24 = vector.shape_cast %23 : vector<1x1x16x4xf32> to vector<16x4xf32>
    %c2 = arith.constant 2 : index
    %c0_13 = arith.constant 0 : index
    %25 = vector.load %arg3[%c2, %c0_13] : memref<3x4xf32, #tpu.memory_space<vmem>>, vector<1x4xf32>
    %26 = vector.broadcast %25 : vector<1x4xf32> to vector<16x4xf32>
    %27 = arith.mulf %24, %26 : vector<16x4xf32>
    %28 = arith.addf %20, %27 : vector<16x4xf32>
    %c0_14 = arith.constant 0 : index
    %c0_15 = arith.constant 0 : index
    %29 = vector.load %arg5[%c0_14, %c0_15] : memref<4x32xf32, #tpu.memory_space<vmem>>, vector<4x32xf32>
    %cst = arith.constant dense<0.000000e+00> : vector<16x32xf32>
    %30 = tpu.matmul %28, %29, %cst {dimension_numbers = #tpu.dot_dimension_numbers<[1], [0], [0], [1], [0, 0, 1, 1], [], []>} : vector<16x4xf32>, vector<4x32xf32>, vector<16x32xf32> -> vector<16x32xf32>
    %c0_16 = arith.constant 0 : index
    %c0_17 = arith.constant 0 : index
    %31 = vector.load %arg6[%c0_16, %c0_17] : memref<1x32xf32, #tpu.memory_space<vmem>>, vector<1x32xf32>
    %32 = vector.broadcast %31 : vector<1x32xf32> to vector<16x32xf32>
    %33 = arith.addf %30, %32 : vector<16x32xf32>
    %c0_18 = arith.constant 0 : index
    %c0_19 = arith.constant 0 : index
    %c0_20 = arith.constant 0 : index
    %34 = vector.load %arg7[%c0_18, %c0_19, %c0_20] : memref<1x16x32xf32, #tpu.memory_space<vmem>>, vector<1x16x32xf32>
    %35 = vector.shape_cast %34 : vector<1x16x32xf32> to vector<16x32xf32>
    %36 = vector.shape_cast %33 : vector<16x32xf32> to vector<1x16x32xf32>
    tpu.vector_store %arg7[%c0_18, %c0_19, %c0_20], %36 {strides = array<i32>} : memref<1x16x32xf32, #tpu.memory_space<vmem>>, vector<1x16x32xf32>,
    return
  }
  func.func @transform_0(%arg0: i32, %arg1: i32) -> (i32, i32, i32, i32) {
    %c0_i32 = arith.constant 0 : i32
    %c0_i32_0 = arith.constant 0 : i32
    %c0_i32_1 = arith.constant 0 : i32
    %c0_i32_2 = arith.constant 0 : i32
    return %c0_i32, %arg0, %c0_i32_0, %c0_i32_1 : i32, i32, i32, i32
  }
  func.func @transform_1(%arg0: i32, %arg1: i32) -> (i32, i32) {
    %c0_i32 = arith.constant 0 : i32
    %c0_i32_0 = arith.constant 0 : i32
    %c0_i32_1 = arith.constant 0 : i32
    return %c0_i32, %c0_i32_0 : i32, i32
  }
  func.func @transform_2(%arg0: i32, %arg1: i32) -> (i32, i32) {
    %c0_i32 = arith.constant 0 : i32
    %c0_i32_0 = arith.constant 0 : i32
    %c0_i32_1 = arith.constant 0 : i32
    return %c0_i32, %c0_i32_0 : i32, i32
  }
  func.func @transform_3(%arg0: i32, %arg1: i32) -> (i32, i32) {
    %c0_i32 = arith.constant 0 : i32
    %c0_i32_0 = arith.constant 0 : i32
    %c0_i32_1 = arith.constant 0 : i32
    return %c0_i32, %c0_i32_0 : i32, i32
  }
  func.func @transform_4(%arg0: i32, %arg1: i32) -> (i32, i32) {
    %c0_i32 = arith.constant 0 : i32
    %c0_i32_0 = arith.constant 0 : i32
    %c0_i32_1 = arith.constant 0 : i32
    return %c0_i32, %c0_i32_0 : i32, i32
  }
  func.func @transform_5(%arg0: i32, %arg1: i32) -> (i32, i32, i32) {
    %c0_i32 = arith.constant 0 : i32
    %c0_i32_0 = arith.constant 0 : i32
    return %arg0, %arg1, %c0_i32 : i32, i32, i32
  }
}

</mosaic_0001>

<llo_original>
// kernel: dsconv_forward.1
$region0: #{dsconv_forward.1}
  #allocation0 [shape = 'u32[]', space=smem, size = 0x4, offset = 0x4, fixed_abs, tag = 'smem constant byte address 0x4 - core index']
  #allocation1 [shape = 'u32[144,128]{1,0:T(1,128)}', space=vmem, size = 0x12000, scoped, tag = 'internal scratch']
  %s0 = inlined_call_operand.vmem [shape: f32[1,2,18,4], index: 0, kind: input, shape index: {}]
  %s1 = inlined_call_operand.vmem [shape: f32[3,4], index: 1, kind: input, shape index: {}]
  %s2 = inlined_call_operand.vmem [shape: f32[1,4], index: 2, kind: input, shape index: {}]
  %s3 = inlined_call_operand.vmem [shape: f32[4,32], index: 3, kind: input, shape index: {}]
  %s4 = inlined_call_operand.vmem [shape: f32[1,32], index: 4, kind: input, shape index: {}]
  %s5 = inlined_call_operand.hbm [shape: f32[2,16,32], index: 5, kind: output, shape index: {}]
  %s6 = sld [smem:[#allocation0]]
  $region53: #{dsconv_forward.1} parent=0
    _
  %s8 = ssub.s32 1, %s6
  %s9 = scalar_select 0, %s8, %s6
  $region1: #{dsconv_forward.1} parent=0
    #allocation2 [shape = 'u8[16384]{0}', space=vmem, size = 0x4000, scoped, tag = 'output window, operand 0']
    #allocation3 [shape = 's32[2]{0}', space=sflag, size = 0x8, scoped, tag = 'scoped memory for dsconv_forward.1']
    %10 = vsyncpa [#allocation3], 0
    %s11 = scalar_lea.sflag [#allocation3], 1
    %12 = vsyncpa %s11, 0
    loop: start=0, step=1, limit=4
    $region2: #{dsconv_forward.1} parent=1 // loop_pre_header
      _
    $region3: #{dsconv_forward.1} parent=1 // loop_header
      %s14 = sphi 0, %s18
      %p15 = scmp.ge.s32.totalorder %s14, 4
      %s21 = sphi 0, %s33
      %s22 = sphi 0, %s29
      %s23 = sphi 0, %s21
      %s24 = sphi 0, %s22
      %s25 = sphi 0, %s23
      %s26 = sphi 0, %s24
      %s36 = sphi 0, %s38
      %s39 = sphi 0, %s36
      %s40 = sphi 0, %s39
      %s56 = sphi 0, %s40
      %s60 = sphi 0, %s60
      %s62 = sphi 0, %s60
      %s63 = sphi 0, %s62
      %s77 = sphi 0, %s63
      %s81 = sphi 0, %s81
      %s83 = sphi 0, %s81
      %s84 = sphi 0, %s83
      %s98 = sphi 0, %s84
      %s102 = sphi 0, %s102
      %s104 = sphi 0, %s102
      %s105 = sphi 0, %s104
      %s119 = sphi 0, %s105
      %s123 = sphi 0, %s123
      %s125 = sphi 0, %s123
      %s126 = sphi 0, %s125
      %s140 = sphi 0, %s126
      %s148 = sphi 0, %s150
      %s151 = sphi 0, %s148
      %s152 = sphi 0, %s151
      %s168 = sphi 0, %s152
    $region4: #{dsconv_forward.1} parent=1 // loop_header_branch
      %17 = sbr.rel (%p15) target = $region8
    $region5: #{dsconv_forward.1} parent=1 // loop_body
      %s19 = ssub.s32 %s14, 1
      %s20 = ssub.s32 %s14, 2
      %s27 = sadd.s32 1, %s22
      %p28 = scmp.ge.s32.totalorder %s27, 1
      %s29 = scalar_select %p28, 0, %s27
      %s30 = sadd.s32 1, %s21
      %s31 = scalar_select %p28, %s30, %s21
      %p32 = scmp.ge.s32.totalorder %s31, 2
      %s33 = scalar_select %p32, 0, %s31
      %s34 = ssub.s32 %s21, %s33
      %p35 = scmp.eq.s32.totalorder %s34, 0
      %s37 = sadd.s32 %s36, 1
      %s38 = scalar_select %p35, %s36, %s37
      %p41 = pneg %p35
      %p42 = scmp.eq.s32.totalorder %s14, 1
      %p43 = por %p41, %p42
      %p44 = scmp.ne.s32.totalorder %s36, %s39
      %p45 = scmp.eq.s32.totalorder %s14, 0
      %p46 = por %p44, %p45
      %p47 = scmp.ne.s32.totalorder %s36, %s39
      %p48 = scmp.eq.s32.totalorder %s19, 1
      %p49 = por %p47, %p48
      %p50 = scmp.ne.s32.totalorder %s39, %s40
      %p51 = scmp.eq.s32.totalorder %s19, 0
      %p52 = por %p50, %p51
      %p53 = scmp.ne.s32.totalorder %s39, %s40
      %p54 = scmp.eq.s32.totalorder %s20, 1
      %p55 = por %p53, %p54
      %p57 = scmp.ne.s32.totalorder %s40, %s56
      %p58 = scmp.eq.s32.totalorder %s20, 0
      %p59 = por %p57, %p58
      %s61 = sadd.s32 %s60, 1
      %p64 = scmp.eq.s32.totalorder %s14, 1
      %p65 = scmp.ne.s32.totalorder %s60, %s62
      %p66 = scmp.eq.s32.totalorder %s14, 0
      %p67 = por %p65, %p66
      %p68 = scmp.ne.s32.totalorder %s60, %s62
      %p69 = scmp.eq.s32.totalorder %s19, 1
      %p70 = por %p68, %p69
      %p71 = scmp.ne.s32.totalorder %s62, %s63
      %p72 = scmp.eq.s32.totalorder %s19, 0
      %p73 = por %p71, %p72
      %p74 = scmp.ne.s32.totalorder %s62, %s63
      %p75 = scmp.eq.s32.totalorder %s20, 1
      %p76 = por %p74, %p75
      %p78 = scmp.ne.s32.totalorder %s63, %s77
      %p79 = scmp.eq.s32.totalorder %s20, 0
      %p80 = por %p78, %p79
      %s82 = sadd.s32 %s81, 1
      %p85 = scmp.eq.s32.totalorder %s14, 1
      %p86 = scmp.ne.s32.totalorder %s81, %s83
      %p87 = scmp.eq.s32.totalorder %s14, 0
      %p88 = por %p86, %p87
      %p89 = scmp.ne.s32.totalorder %s81, %s83
      %p90 = scmp.eq.s32.totalorder %s19, 1
      %p91 = por %p89, %p90
      %p92 = scmp.ne.s32.totalorder %s83, %s84
      %p93 = scmp.eq.s32.totalorder %s19, 0
      %p94 = por %p92, %p93
      %p95 = scmp.ne.s32.totalorder %s83, %s84
      %p96 = scmp.eq.s32.totalorder %s20, 1
      %p97 = por %p95, %p96
      %p99 = scmp.ne.s32.totalorder %s84, %s98
      %p100 = scmp.eq.s32.totalorder %s20, 0
      %p101 = por %p99, %p100
      %s103 = sadd.s32 %s102, 1
      %p106 = scmp.eq.s32.totalorder %s14, 1
      %p107 = scmp.ne.s32.totalorder %s102, %s104
      %p108 = scmp.eq.s32.totalorder %s14, 0
      %p109 = por %p107, %p108
      %p110 = scmp.ne.s32.totalorder %s102, %s104
      %p111 = scmp.eq.s32.totalorder %s19, 1
      %p112 = por %p110, %p111
      %p113 = scmp.ne.s32.totalorder %s104, %s105
      %p114 = scmp.eq.s32.totalorder %s19, 0
      %p115 = por %p113, %p114
      %p116 = scmp.ne.s32.totalorder %s104, %s105
      %p117 = scmp.eq.s32.totalorder %s20, 1
      %p118 = por %p116, %p117
      %p120 = scmp.ne.s32.totalorder %s105, %s119
      %p121 = scmp.eq.s32.totalorder %s20, 0
      %p122 = por %p120, %p121
      %s124 = sadd.s32 %s123, 1
      %p127 = scmp.eq.s32.totalorder %s14, 1
      %p128 = scmp.ne.s32.totalorder %s123, %s125
      %p129 = scmp.eq.s32.totalorder %s14, 0
      %p130 = por %p128, %p129
      %p131 = scmp.ne.s32.totalorder %s123, %s125
      %p132 = scmp.eq.s32.totalorder %s19, 1
      %p133 = por %p131, %p132
      %p134 = scmp.ne.s32.totalorder %s125, %s126
      %p135 = scmp.eq.s32.totalorder %s19, 0
      %p136 = por %p134, %p135
      %p137 = scmp.ne.s32.totalorder %s125, %s126
      %p138 = scmp.eq.s32.totalorder %s20, 1
      %p139 = por %p137, %p138
      %p141 = scmp.ne.s32.totalorder %s126, %s140
      %p142 = scmp.eq.s32.totalorder %s20, 0
      %p143 = por %p141, %p142
      %s144 = ssub.s32 %s21, %s33
      %s145 = ssub.s32 %s22, %s29
      %s146 = sor.u32 %s144, %s145
      %p147 = scmp.eq.s32.totalorder %s146, 0
      %s149 = sadd.s32 %s148, 1
      %s150 = scalar_select %p147, %s148, %s149
      %p153 = pneg %p147
      %p154 = scmp.eq.s32.totalorder %s14, 1
      %p155 = por %p153, %p154
      %p156 = scmp.ne.s32.totalorder %s148, %s151
      %p157 = scmp.eq.s32.totalorder %s14, 0
      %p158 = por %p156, %p157
      %p159 = scmp.ne.s32.totalorder %s148, %s151
      %p160 = scmp.eq.s32.totalorder %s19, 1
      %p161 = por %p159, %p160
      %p162 = scmp.ne.s32.totalorder %s151, %s152
      %p163 = scmp.eq.s32.totalorder %s19, 0
      %p164 = por %p162, %p163
      %p165 = scmp.ne.s32.totalorder %s151, %s152
      %p166 = scmp.eq.s32.totalorder %s20, 1
      %p167 = por %p165, %p166
      %p169 = scmp.ne.s32.totalorder %s152, %s168
      %p170 = scmp.eq.s32.totalorder %s20, 0
      %p171 = por %p169, %p170
      %p172 = scmp.le.s32.totalorder 1, %s14
      %p173 = scmp.lt.s32.totalorder %s14, 3
      %p174 = pnand %p172, %p173
      %p175 = pneg %p174
      // Predicated region
      $region9: #{dsconv_forward.1} parent=5 // pred_check
        _
      $region10: #{dsconv_forward.1} parent=5 // pred_check_branch
        %177 = sbr.rel (%p174) target = $region12
      $region11: #{dsconv_forward.1} parent=5 // pred_region
        %s178 = ssub.s32 %s14, 1
        // Predicated region
        $region13: #{dsconv_forward.1} parent=11 // pred_check
          %p179 = pneg %p73
        $region14: #{dsconv_forward.1} parent=11 // pred_check_branch
          %181 = sbr.rel (%p179) target = $region16
        $region15: #{dsconv_forward.1} parent=11 // pred_region
          _
        $region16: #{dsconv_forward.1} parent=11 // pred_fallthru
          _
        // Predicated region
        $region17: #{dsconv_forward.1} parent=11 // pred_check
          %p182 = pneg %p94
        $region18: #{dsconv_forward.1} parent=11 // pred_check_branch
          %184 = sbr.rel (%p182) target = $region20
        $region19: #{dsconv_forward.1} parent=11 // pred_region
          _
        $region20: #{dsconv_forward.1} parent=11 // pred_fallthru
          _
        // Predicated region
        $region21: #{dsconv_forward.1} parent=11 // pred_check
          %p185 = pneg %p115
        $region22: #{dsconv_forward.1} parent=11 // pred_check_branch
          %187 = sbr.rel (%p185) target = $region24
        $region23: #{dsconv_forward.1} parent=11 // pred_region
          _
        $region24: #{dsconv_forward.1} parent=11 // pred_fallthru
          _
        // Predicated region
        $region25: #{dsconv_forward.1} parent=11 // pred_check
          %p188 = pneg %p136
        $region26: #{dsconv_forward.1} parent=11 // pred_check_branch
          %190 = sbr.rel (%p188) target = $region28
        $region27: #{dsconv_forward.1} parent=11 // pred_region
          _
        $region28: #{dsconv_forward.1} parent=11 // pred_fallthru
          _
      $region12: #{dsconv_forward.1} parent=5 // pred_fallthru
        _
      %p191 = scmp.lt.s32.totalorder %s14, 2
      // Predicated region
      $region29: #{dsconv_forward.1} parent=5 // pred_check
        %p192 = pneg %p191
      $region30: #{dsconv_forward.1} parent=5 // pred_check_branch
        %194 = sbr.rel (%p192) target = $region32
      $region31: #{dsconv_forward.1} parent=5 // pred_region
        // Predicated region
        $region33: #{dsconv_forward.1} parent=31 // pred_check
          %p195 = pneg %p46
        $region34: #{dsconv_forward.1} parent=31 // pred_check_branch
          %197 = sbr.rel (%p195) target = $region36
        $region35: #{dsconv_forward.1} parent=31 // pred_region
          %p198 = scmp.lt.s32.totalorder %s21, 1
          %s199 = scalar_select %p198, %s21, 1
          %s200 = smul.addr %s199, 3
          %s201 = smul.addr %s200, 8
          %s202 = scalar_lea.vmem %s0, %s201
        $region36: #{dsconv_forward.1} parent=31 // pred_fallthru
          _
      $region32: #{dsconv_forward.1} parent=5 // pred_fallthru
        _
      %p203 = scmp.le.s32.totalorder 1, %s14
      %p204 = scmp.lt.s32.totalorder %s14, 3
      %p205 = pnand %p203, %p204
      %p206 = pneg %p205
      // Predicated region
      $region37: #{dsconv_forward.1} parent=5 // pred_check
        _
      $region38: #{dsconv_forward.1} parent=5 // pred_check_branch
        %208 = sbr.rel (%p205) target = $region40
      $region39: #{dsconv_forward.1} parent=5 // pred_region
        %s209 = ssub.s32 %s14, 1
        %p210 = scmp.lt.s32.totalorder %s23, 1
        %s211 = scalar_select %p210, %s23, 1
        %s212 = smul.addr %s211, 3
        %s213 = smul.addr %s212, 8
        %s214 = scalar_lea.vmem %s0, %s213
        %p215 = pneg %p52
        %p216 = pneg %p49
        %p217 = pneg %p73
        %p218 = pneg %p70
        %p219 = pneg %p94
        %p220 = pneg %p91
        %p221 = pneg %p115
        %p222 = pneg %p112
        %p223 = pneg %p136
        %p224 = pneg %p133
        %p225 = pneg %p164
        %p226 = pneg %p161
        %s227 = sand.u32 %s151, 1
        %s228 = scalar_lea.sflag [#allocation3], %s227
        %s229 = sand.u32 %s151, 1
        %s230 = smul.addr %s229, 16
        %s231 = scalar_lea.vmem [#allocation2], %s230
        %p232 = scmp.lt.s32.totalorder %s23, 1
        %s233 = scalar_select %p232, %s23, 1
        %s234 = smul.addr %s233, 3
        %s235 = smul.addr %s234, 8
        %s236 = scalar_lea.vmem %s0, %s235
        %s237 = smul.u32 2, %s24
        %s238 = smul.u32 %s24, 16
        %v239 = vld [vmem:[%s2] sm:$0x1]
        %v241 = vlaneseq
        %v242 = vshrl.u32 %v241, 7
        %v243 = vsub.s32 0, %v242
        %v244 = vrot.slane %v239, %v243
        %s246 = scalar_lea.vmem %s236, %s238
        %v247 = vld [vmem:[%s246] sm:$0xff]
        %v248 = vld [vmem:[%s246 + $0x8] sm:$0xff]
        %v249 = vld [vmem:[%s1] sm:$0x1]
        %v250 = vlaneseq
        %v251 = vshrl.u32 %v250, 7
        %v252 = vsub.s32 0, %v251
        %v253 = vrot.slane %v249, %v252
        %v254 = vmul.f32 %v247, %v253
        %v255 = vmul.f32 %v248, %v253
        %v256 = vadd.f32 %v244, %v254
        %v257 = vadd.f32 %v244, %v255
        %s258 = sadd.s32 %s238, 1
        %s259 = scalar_lea.vmem %s236, %s258
        %v260 = vld [vmem:[%s259] sm:$0xff]
        %v261 = vld [vmem:[%s259 + $0x8] sm:$0xff]
        %v262 = vld [vmem:[%s1 + $0x1] sm:$0x1]
        %v263 = vlaneseq
        %v264 = vshrl.u32 %v263, 7
        %v265 = vsub.s32 0, %v264
        %v266 = vrot.slane %v262, %v265
        %v267 = vmul.f32 %v260, %v266
        %v268 = vmul.f32 %v261, %v266
        %v269 = vadd.f32 %v256, %v267
        %v270 = vadd.f32 %v257, %v268
        %s271 = sadd.s32 %s238, 2
        %s272 = scalar_lea.vmem %s236, %s271
        %v273 = vld [vmem:[%s272] sm:$0xff]
        %v274 = vld [vmem:[%s272 + $0x8] sm:$0xff]
        %v275 = vld [vmem:[%s1 + $0x2] sm:$0x1]
        %v276 = vlaneseq
        %v277 = vshrl.u32 %v276, 7
        %v278 = vsub.s32 0, %v277
        %v279 = vrot.slane %v275, %v278
        %v280 = vmul.f32 %v273, %v279
        %v281 = vmul.f32 %v274, %v279
        %v282 = vadd.f32 %v269, %v280
        %v283 = vadd.f32 %v270, %v281
        %v284 = vld [vmem:[%s3] sm:$0xf]
        %v285 = vld [vmem:[%s4] sm:$0x1]
        %v287 = vlaneseq
        %v288 = vshrl.u32 %v287, 7
        %v289 = vsub.s32 0, %v288
        %v290 = vrot.slane %v285, %v289
        %vm292 = vcmask 31744
        %v294 = vsel %vm292, %v282, 0
        %v297 = vsel %vm292, %v283, 0
        %vm299 = vcmask 1043456
        %v301 = vsel %vm299, %v284, 0
        %303 = vmatprep.subr.mxu0 0.0
        %304 = vmatpush1.msra.mxu0 %v301
        %305 = vmatprep.subr.mxu0 0.0
        %306 = vmatpush1.msra.mxu0 0.0
        %307 = vmatprep.subr.mxu0 0.0
        %308 = vmatpush1.msra.mxu0 0.0
        %309 = vmatprep.subr.mxu0 0.0
        %310 = vmatpush1.msra.mxu0 0.0
        %311 = vmatprep.subr.mxu0 0.0
        %312 = vmatpush1.msra.mxu0 0.0
        %313 = vmatprep.subr.mxu0 0.0
        %314 = vmatpush1.msra.mxu0 0.0
        %315 = vmatprep.subr.mxu0 0.0
        %316 = vmatpush1.msra.mxu0 0.0
        %317 = vmatprep.subr.mxu0 0.0
        %318 = vmatpush1.msra.mxu0 0.0
        %319 = vmatprep.subr.mxu0 0.0
        %320 = vmatpush1.msra.mxu0 0.0
        %321 = vmatprep.subr.mxu0 0.0
        %322 = vmatpush1.msra.mxu0 0.0
        %323 = vmatprep.subr.mxu0 0.0
        %324 = vmatpush1.msra.mxu0 0.0
        %325 = vmatprep.subr.mxu0 0.0
        %326 = vmatpush1.msra.mxu0 0.0
        %327 = vmatprep.subr.mxu0 0.0
        %328 = vmatpush1.msra.mxu0 0.0
        %329 = vmatprep.subr.mxu0 0.0
        %330 = vmatpush1.msra.mxu0 0.0
        %331 = vmatprep.subr.mxu0 0.0
        %332 = vmatpush1.msra.mxu0 0.0
        %333 = vmatprep.subr.mxu0 0.0
        %334 = vmatpush1.msra.mxu0 0.0
        %335 = vmatprep.subr.mxu0 0.0
        %336 = vmatpush1.msra.mxu0 0.0
        %337 = vmatprep.subr.mxu0 0.0
        %338 = vmatpush1.msra.mxu0 0.0
        %339 = vmatprep.subr.mxu0 0.0
        %340 = vmatpush1.msra.mxu0 0.0
        %341 = vmatprep.subr.mxu0 0.0
        %342 = vmatpush1.msra.mxu0 0.0
        %343 = vmatprep.subr.mxu0 0.0
        %344 = vmatpush1.msra.mxu0 0.0
        %345 = vmatprep.subr.mxu0 0.0
        %346 = vmatpush1.msra.mxu0 0.0
        %347 = vmatprep.subr.mxu0 0.0
        %348 = vmatpush1.msra.mxu0 0.0
        %349 = vmatprep.subr.mxu0 0.0
        %350 = vmatpush1.msra.mxu0 0.0
        %351 = vmatprep.subr.mxu0 0.0
        %352 = vmatpush1.msra.mxu0 0.0
        %353 = vmatprep.subr.mxu0 0.0
        %354 = vmatpush1.msra.mxu0 0.0
        %355 = vmatprep.subr.mxu0 0.0
        %356 = vmatpush1.msra.mxu0 0.0
        %357 = vmatprep.subr.mxu0 0.0
        %358 = vmatpush1.msra.mxu0 0.0
        %359 = vmatprep.subr.mxu0 0.0
        %360 = vmatpush1.msra.mxu0 0.0
        %361 = vmatprep.subr.mxu0 0.0
        %362 = vmatpush1.msra.mxu0 0.0
        %363 = vmatprep.subr.mxu0 0.0
        %364 = vmatpush1.msra.mxu0 0.0
        %365 = vmatprep.subr.mxu0 0.0
        %366 = vmatpush1.msra.mxu0 0.0
        %367 = vmatprep.mubr.f32.mxu0 0.0
        %368 = vmatmul.mubr.f32.gmra.mrb[0].mxu0 %v294
        %v369 = vpop.f32.mrb[0].mxu0
        %v370 = vadd.f32 %v290, %v369
        %v371 = vpop.f32.mrb[0].mxu0
        %372 = vmatprep.mubr.f32.mxu0 0.0
        %373 = vmatmul.mubr.f32.gmra.mrb[0].mxu0 %v297
        %v374 = vpop.f32.mrb[0].mxu0
        %v375 = vadd.f32 %v290, %v374
        %v376 = vpop.f32.mrb[0].mxu0
        %377 = vdwg.mxu0
        %vm378 = vcmask 261120
        %379 = vst.msk [vmem:[%s231] sm:$0xff] %vm378, %v370
        %380 = vst.msk [vmem:[%s231 + $0x8] sm:$0xff] %vm378, %v375
        %s381 = sand.u32 %s151, 1
        %s382 = scalar_lea.sflag [#allocation3], %s381
        %s383 = sand.u32 %s151, 1
        %s384 = smul.addr %s383, 16
        %s385 = scalar_lea.vmem [#allocation2], %s384
        // Predicated region
        $region41: #{dsconv_forward.1} parent=39 // pred_check
          %p386 = pneg %p161
        $region42: #{dsconv_forward.1} parent=39 // pred_check_branch
          %388 = sbr.rel (%p386) target = $region44
        $region43: #{dsconv_forward.1} parent=39 // pred_region
          %s389 = smul.u32 2, %s24
          %s391 = ssub.s32 256, 256
          %392 = vsyncadd %s382, %s391
          %s393 = smul.addr %s23, 2
          %s394 = sadd.s32 %s389, %s393
          %s395 = smul.addr %s394, 128
          %s396 = scalar_lea.hbm %s5, %s395
          %s397 = sshll.u32 %s385, 4
          %s398 = int_to_ptr.vmem [resolvable:$true] %s397
          %403 = dma.vmem_to_hbm [thread:$0]  %s398, 256, %s396, %s382, 128, 128, 8
        $region44: #{dsconv_forward.1} parent=39 // pred_fallthru
          _
      $region40: #{dsconv_forward.1} parent=5 // pred_fallthru
        _
      %p404 = scmp.le.s32.totalorder 2, %s14
      // Predicated region
      $region45: #{dsconv_forward.1} parent=5 // pred_check
        %p405 = pneg %p404
      $region46: #{dsconv_forward.1} parent=5 // pred_check_branch
        %407 = sbr.rel (%p405) target = $region48
      $region47: #{dsconv_forward.1} parent=5 // pred_region
        %s408 = ssub.s32 %s14, 2
        // Predicated region
        $region49: #{dsconv_forward.1} parent=47 // pred_check
          %p409 = pneg %p167
        $region50: #{dsconv_forward.1} parent=47 // pred_check_branch
          %411 = sbr.rel (%p409) target = $region52
        $region51: #{dsconv_forward.1} parent=47 // pred_region
          %s412 = sand.u32 %s152, 1
          %s413 = scalar_lea.sflag [#allocation3], %s412
          %s414 = sand.u32 %s152, 1
          %s415 = smul.addr %s414, 16
          %s416 = scalar_lea.vmem [#allocation2], %s415
          %417 = dma.done %s413, 256
        $region52: #{dsconv_forward.1} parent=47 // pred_fallthru
          _
      $region48: #{dsconv_forward.1} parent=5 // pred_fallthru
        _
    $region6: #{dsconv_forward.1} parent=1 // loop_footer
      %s18 = sadd.s32 1, %s14
    $region7: #{dsconv_forward.1} parent=1 // loop_footer_branch
      %13 = sbr.rel target = $region3
    $region8: #{dsconv_forward.1} parent=1 // loop_exit
      _
    %418 = vsyncpa [#allocation3], 1
    %s419 = scalar_lea.sflag [#allocation3], 1
    %420 = vsyncpa %s419, 1

</llo_original>
